<compile_context>
chip_gen: v6e
topology: v6e:2x2x1
jax: 0.10.0
libtpu: 0.0.40
codegen_flags: <defaults>
</compile_context>

<pallas_src>
import functools

import jax
import jax.numpy as jnp
from jax.experimental import pallas as pl
from jax.experimental.pallas import tpu as pltpu


def _round_up(x, m):
    return ((x + m - 1) // m) * m


def _pick_v_tile(Vp, max_tile=4096):
    """Largest multiple-of-128 divisor of Vp not exceeding max_tile.

    Vp is always a multiple of 128 (padded in prepare_word_to_vec_params),
    so the result is at least 128 and the fc1 reduction always streams.
    """
    assert Vp % 128 == 0
    if Vp <= max_tile:
        return Vp
    best = 128
    t = 256
    while t <= max_tile:
        if Vp % t == 0:
            best = t
        t += 128
    return best


def _tpu_vmem_capacity_bytes(default=64 << 20):
    """Physical VMEM per TensorCore (best effort; conservative default)."""
    try:
        info = pltpu.get_tpu_info()
        cap = int(getattr(info, "vmem_capacity_bytes", default))
        return cap if cap > 0 else default
    except Exception:
        # Hardware-info query only; never affects numerics.  The conservative
        # default (64 MiB) is safe on every TPU generation.
        return default


def _w2v_kernel(x_ref, w1t_ref, b1_ref, w2t_ref, b2_ref, o_ref, h_acc,
                *, compute_dtype, row_chunk, n_chunk):
    vi = pl.program_id(1)

    @pl.when(vi == 0)
    def _init():
        h_acc[...] = jnp.zeros_like(h_acc)

    # fc1 partial product for this vocabulary slab.  x was cast to
    # compute_dtype (bf16) in the wrapper, so there is no per-step cast here;
    # the MXU accumulates in f32 into the VMEM scratch.
    h_acc[...] += jnp.dot(x_ref[...], w1t_ref[...],
                          preferred_element_type=jnp.float32)

    @pl.when(vi == pl.num_programs(1) - 1)
    def _epilogue():
        # fc1 bias added once per output tile (single broadcast), not per
        # reduction step and not per fc2 sub-chunk.
        h_acc[...] += b1_ref[...]
        bt = h_acc.shape[0]
        v_out = o_ref.shape[-1]
        # fc2 + b2 in (row_chunk, n_chunk) pieces: keeps the MXU fed while
        # bounding live f32 result temporaries (no full [bt, V] f32 temp).
        for r0 in range(0, bt, row_chunk):            # static sub-chunks
            h = h_acc[pl.ds(r0, row_chunk), :].astype(compute_dtype)
            for n0 in range(0, v_out, n_chunk):       # static, 128-aligned
                y = jnp.dot(h, w2t_ref[:, pl.ds(n0, n_chunk)],
                            preferred_element_type=jnp.float32)
                o_ref[pl.ds(r0, row_chunk), pl.ds(n0, n_chunk)] = (
                    y + b2_ref[:, pl.ds(n0, n_chunk)]).astype(o_ref.dtype)


def prepare_word_to_vec_params(w1, b1, w2, b2, *, compute_dtype=jnp.bfloat16):
    """One-time parameter prep (transpose, 128-padding, compute-dtype cast).

    Hoisted out of the per-call forward path.
      w1: [E, V] (fc1.weight), b1: [E], w2: [V, E] (fc2.weight), b2: [V].
    Returns (W1^T [Vp,Ep] compute_dtype, b1 [1,Ep] f32,
             W2^T [Ep,Vp] compute_dtype, b2 [1,Vp] f32)
    with Vp/Ep zero-padded to multiples of 128; the forward pass slices the
    output back to the true vocabulary size.
    """
    E, V = w1.shape
    assert w2.shape == (V, E) and b1.shape == (E,) and b2.shape == (V,)
    Ep, Vp = _round_up(E, 128), _round_up(V, 128)
    w1t = jnp.pad(jnp.asarray(w1, jnp.float32).T, ((0, Vp - V), (0, Ep - E)))
    w2t = jnp.pad(jnp.asarray(w2, jnp.float32).T, ((0, Ep - E), (0, Vp - V)))
    b1r = jnp.pad(jnp.asarray(b1, jnp.float32), (0, Ep - E)).reshape(1, Ep)
    b2r = jnp.pad(jnp.asarray(b2, jnp.float32), (0, Vp - V)).reshape(1, Vp)
    return (w1t.astype(compute_dtype), b1r, w2t.astype(compute_dtype), b2r)


def word_to_vec_forward(x, w1t, b1, w2t, b2, *, batch_tile=None, v_tile=None,
                        out_dtype=None):
    """x: [B, V] (true vocabulary size); params from prepare_word_to_vec_params.

    out_dtype: None -> x.dtype (PyTorch parity).  Pass jnp.bfloat16 to halve
    output HBM/VMEM traffic when the logits feed a softmax/loss anyway.
    """
    B, V = x.shape
    Vp, Ep = w1t.shape
    assert Vp >= V and Vp % 128 == 0 and Ep % 128 == 0
    assert w2t.shape == (Ep, Vp) and b1.shape == (1, Ep) and b2.shape == (1, Vp)
    compute_dtype = w1t.dtype
    if out_dtype is None:
        out_dtype = x.dtype
    itm_c = jnp.dtype(compute_dtype).itemsize
    itm_o = jnp.dtype(out_dtype).itemsize

    # Generation-aware VMEM cap (leave headroom for compiler scratch):
    # ~112 MiB on v5e/v6e (128 MiB physical), ~56 MiB on v7x (64 MiB).
    vmem_cap = _tpu_vmem_capacity_bytes()
    vmem_budget = max((vmem_cap * 7) // 8, 32 << 20)
    # 64-MiB-VMEM chips (v7x-like) have 2 TensorCores per chip: keep tiles
    # modest and make sure the "parallel" batch axis has >= 2 tiles.
    low_vmem_chip = vmem_cap <= (64 << 20)

    # --- batch tiling (ragged batches are zero-padded and sliced back) ---
    if batch_tile is None:
        if B >= 512 and not low_vmem_chip:
            batch_tile = 512
        elif B >= 256:
            batch_tile = 256
        elif B >= 128:
            batch_tile = 128
        else:
            batch_tile = _round_up(B, 8)
    batch_tile = max(_round_up(batch_tile, 8), 8)

    # --- fc1 reduction tiling: W1^T streams in [v_tile, Ep] slabs ---
    if v_tile is None:
        v_tile = _pick_v_tile(Vp)
    assert Vp % v_tile == 0 and v_tile % 128 == 0

    # Static epilogue sub-chunking.
    def _chunks(bt):
        if bt % 256 == 0:
            rc = 256
        elif bt % 128 == 0:
            rc = 128
        else:
            rc = bt
        nc = 512 if Vp % 512 == 0 else (256 if Vp % 256 == 0 else 128)
        return rc, min(nc, Vp)

    # Itemized VMEM budget (no hedging multiplier on top of it).
    def _vmem_needed(bt, vt):
        rc, nc = _chunks(bt)
        return (2 * bt * vt * itm_c            # x slabs (double-buffered)
                + 2 * vt * Ep * itm_c          # W1^T slabs (double-buffered)
                + 2 * Ep * Vp * itm_c          # resident W2^T (default bufs)
                + 2 * (Ep + Vp) * 4            # resident biases
                + 2 * bt * Vp * itm_o          # output tiles (double-buffered)
                + bt * Ep * 4                  # f32 hidden accumulator scratch
                + rc * Ep * itm_c              # bf16 h temp in epilogue
                + rc * nc * 4)                 # fc2 partial-result temp

    # Shrink tiles until the budget fits (output tile / W2^T dominate for big
    # V; for vocabularies too large even at batch_tile=128 the next step would
    # be streaming W2^T from HBM with manual DMA in the epilogue).
    while _vmem_needed(batch_tile, v_tile) > vmem_budget and batch_tile > 128:
        batch_tile = max(_round_up(batch_tile // 2, 8), 8)
    while _vmem_needed(batch_tile, v_tile) > vmem_budget and v_tile > 128:
        new_vt = _pick_v_tile(Vp, max_tile=max(v_tile // 2, 128))
        if new_vt >= v_tile:
            break
        v_tile = new_vt

    Bp = _round_up(B, batch_tile)
    if low_vmem_chip and Bp // batch_tile < 2 and batch_tile >= 16:
        # Give the second TensorCore a batch tile to work on.
        batch_tile = max(_round_up(batch_tile // 2, 8), 8)
        Bp = _round_up(B, batch_tile)

    n_bt, n_vt = Bp // batch_tile, Vp // v_tile
    row_chunk, n_chunk = _chunks(batch_tile)

    vmem_needed = _vmem_needed(batch_tile, v_tile)
    vmem_limit = int(min(max(vmem_needed + (4 << 20), 16 << 20), vmem_budget))

    # Pad + cast x once in the wrapper (bf16 halves its HBM/DMA bytes and its
    # VMEM slab footprint; padded rows/cols are zero so they contribute 0).
    x_p = x
    if Bp != B or Vp != V:
        x_p = jnp.pad(x_p, ((0, Bp - B), (0, Vp - V)))
    x_p = x_p.astype(compute_dtype)

    cost = pl.CostEstimate(
        flops=4 * Bp * Vp * Ep,                 # two matmuls
        transcendentals=0,
        bytes_accessed=int(
            Bp * Vp * itm_c                     # x (compute dtype)
            + n_bt * Vp * Ep * itm_c            # W1^T re-streamed per batch tile
            + Ep * Vp * itm_c                   # resident W2^T (fetched once)
            + (Ep + Vp) * 4                     # biases
            + Bp * Vp * itm_o))                 # output writeback

    out = pl.pallas_call(
        functools.partial(_w2v_kernel, compute_dtype=compute_dtype,
                          row_chunk=row_chunk, n_chunk=n_chunk),
        out_shape=jax.ShapeDtypeStruct((Bp, Vp), out_dtype),
        grid_spec=pltpu.PrefetchScalarGridSpec(
            num_scalar_prefetch=0,
            grid=(n_bt, n_vt),
            in_specs=[
                pl.BlockSpec((batch_tile, v_tile), lambda bi, vi: (bi, vi)),
                pl.BlockSpec((v_tile, Ep), lambda bi, vi: (vi, 0)),
                pl.BlockSpec((1, Ep), lambda bi, vi: (0, 0)),
                pl.BlockSpec((Ep, Vp), lambda bi, vi: (0, 0)),
                pl.BlockSpec((1, Vp), lambda bi, vi: (0, 0)),
            ],
            out_specs=pl.BlockSpec((batch_tile, Vp), lambda bi, vi: (bi, 0)),
            scratch_shapes=[pltpu.VMEM((batch_tile, Ep), jnp.float32)],
        ),
        compiler_params=pltpu.CompilerParams(
            dimension_semantics=("parallel", "arbitrary"),
            vmem_limit_bytes=vmem_limit),
        cost_estimate=cost,
    )(x_p, w1t, b1, w2t, b2)

    if Bp != B or Vp != V:
        out = out[:B, :V]
    return out


if __name__ == "__main__":
    VOCAB = 500    # deliberately NOT a multiple of 128: exercises V padding
    EMBED = 120    # deliberately NOT a multiple of 128: exercises E padding
    BATCH = 200    # ragged: exercises batch padding and >= 2 batch tiles

    key = jax.random.PRNGKey(0)
    kx, k1, kb1, k2, kb2 = jax.random.split(key, 5)

    # Deterministic parameter init (mimics torch.nn.Linear uniform bounds).
    lim1 = 1.0 / (VOCAB ** 0.5)
    lim2 = 1.0 / (EMBED ** 0.5)
    w1 = jax.random.uniform(k1, (EMBED, VOCAB), jnp.float32, -lim1, lim1)  # fc1.weight
    b1 = jax.random.uniform(kb1, (EMBED,), jnp.float32, -lim1, lim1)       # fc1.bias
    w2 = jax.random.uniform(k2, (VOCAB, EMBED), jnp.float32, -lim2, lim2)  # fc2.weight
    b2 = jax.random.uniform(kb2, (VOCAB,), jnp.float32, -lim2, lim2)       # fc2.bias

    x = jax.random.normal(kx, (BATCH, VOCAB), jnp.float32)

    # One-time parameter prep (transpose, 128-pad, bf16 cast), outside the
    # per-call forward path.
    params = jax.block_until_ready(prepare_word_to_vec_params(w1, b1, w2, b2))

    # v_tile=128 exercises the streamed fc1 reduction path at demo size.
    out = word_to_vec_forward(x, *params, v_tile=128)
    out = jax.block_until_ready(out)
    assert out.shape == (BATCH, VOCAB)
    assert out.dtype == x.dtype

    # Reference matched to the kernel math (bf16 operands, f32 accumulate).
    f32 = jnp.float32
    xb = x.astype(jnp.bfloat16).astype(f32)
    w1b = w1.astype(jnp.bfloat16).astype(f32)
    w2b = w2.astype(jnp.bfloat16).astype(f32)
    h_ref = xb @ w1b.T + b1
    ref = h_ref.astype(jnp.bfloat16).astype(f32) @ w2b.T + b2
    assert jnp.allclose(out, ref, atol=2e-3, rtol=2e-3), \
        float(jnp.max(jnp.abs(out - ref)))

    # Loose sanity check against the full-f32 PyTorch forward semantics.
    ref_f32 = (x @ w1.T + b1) @ w2.T + b2
    assert jnp.allclose(out, ref_f32, atol=5e-2, rtol=5e-2)

    print("KERNEL_OK")
</pallas_src>

<mosaic_0001>
module attributes {stable_mosaic.version = 11 : i64} {
  func.func @_w2v_kernel(%arg0: i32, %arg1: i32, %arg2: memref<128x128xbf16, #tpu.memory_space<vmem>>, %arg3: memref<128x128xbf16, #tpu.memory_space<vmem>>, %arg4: memref<1x128xf32, #tpu.memory_space<vmem>>, %arg5: memref<128x512xbf16, #tpu.memory_space<vmem>>, %arg6: memref<1x512xf32, #tpu.memory_space<vmem>>, %arg7: memref<128x512xf32, #tpu.memory_space<vmem>>, %arg8: memref<128x128xf32, #tpu.memory_space<vmem>>) attributes {dimension_semantics = [#tpu.dimension_semantics<parallel>, #tpu.dimension_semantics<arbitrary>], iteration_bounds = array<i64: 2, 4>, scalar_prefetch = 0 : i64, scratch_operands = 1 : i64, tpu.core_type = #tpu.core_type<tc>, window_params = [{transform_indices = @transform_0, window_bounds = array<i64: 128, 128>}, {transform_indices = @transform_1, window_bounds = array<i64: 128, 128>}, {pipeline_mode = #tpu.pipeline_mode<synchronous>, transform_indices = @transform_2, window_bounds = array<i64: 1, 128>}, {pipeline_mode = #tpu.pipeline_mode<synchronous>, transform_indices = @transform_3, window_bounds = array<i64: 128, 512>}, {pipeline_mode = #tpu.pipeline_mode<synchronous>, transform_indices = @transform_4, window_bounds = array<i64: 1, 512>}, {transform_indices = @transform_5, window_bounds = array<i64: 128, 512>}]} {
    %c0_i32 = arith.constant 0 : i32
    %0 = arith.cmpi eq, %arg1, %c0_i32 : i32
    %1 = arith.extui %0 : i1 to i32
    %c0_i32_0 = arith.constant 0 : i32
    %2 = arith.cmpi ne, %1, %c0_i32_0 : i32
    scf.if %2 {
      %cst_9 = arith.constant 0.000000e+00 : f32
      %12 = vector.broadcast %cst_9 : f32 to vector<128x128xf32>
      %c0_10 = arith.constant 0 : index
      %c0_11 = arith.constant 0 : index
      %13 = vector.load %arg8[%c0_10, %c0_11] : memref<128x128xf32, #tpu.memory_space<vmem>>, vector<128x128xf32>
      tpu.vector_store %arg8[%c0_10, %c0_11], %12 {strides = array<i32>} : memref<128x128xf32, #tpu.memory_space<vmem>>, vector<128x128xf32>,
    } else {
    }
    %c0 = arith.constant 0 : index
    %c0_1 = arith.constant 0 : index
    %3 = vector.load %arg8[%c0, %c0_1] : memref<128x128xf32, #tpu.memory_space<vmem>>, vector<128x128xf32>
    %c0_2 = arith.constant 0 : index
    %c0_3 = arith.constant 0 : index
    %4 = vector.load %arg2[%c0_2, %c0_3] : memref<128x128xbf16, #tpu.memory_space<vmem>>, vector<128x128xbf16>
    %c0_4 = arith.constant 0 : index
    %c0_5 = arith.constant 0 : index
    %5 = vector.load %arg3[%c0_4, %c0_5] : memref<128x128xbf16, #tpu.memory_space<vmem>>, vector<128x128xbf16>
    %cst = arith.constant dense<0.000000e+00> : vector<128x128xf32>
    %6 = tpu.matmul %4, %5, %cst {dimension_numbers = #tpu.dot_dimension_numbers<[1], [0], [0], [1], [0, 0, 1, 1], [], []>} : vector<128x128xbf16>, vector<128x128xbf16>, vector<128x128xf32> -> vector<128x128xf32>
    %7 = arith.addf %3, %6 : vector<128x128xf32>
    %c0_6 = arith.constant 0 : index
    %c0_7 = arith.constant 0 : index
    %8 = vector.load %arg8[%c0_6, %c0_7] : memref<128x128xf32, #tpu.memory_space<vmem>>, vector<128x128xf32>
    tpu.vector_store %arg8[%c0_6, %c0_7], %7 {strides = array<i32>} : memref<128x128xf32, #tpu.memory_space<vmem>>, vector<128x128xf32>,
    %c3_i32 = arith.constant 3 : i32
    %9 = arith.cmpi eq, %arg1, %c3_i32 : i32
    %10 = arith.extui %9 : i1 to i32
    %c0_i32_8 = arith.constant 0 : i32
    %11 = arith.cmpi ne, %10, %c0_i32_8 : i32
    scf.if %11 {
      %c0_9 = arith.constant 0 : index
      %c0_10 = arith.constant 0 : index
      %12 = vector.load %arg8[%c0_9, %c0_10] : memref<128x128xf32, #tpu.memory_space<vmem>>, vector<128x128xf32>
      %c0_11 = arith.constant 0 : index
      %c0_12 = arith.constant 0 : index
      %13 = vector.load %arg4[%c0_11, %c0_12] : memref<1x128xf32, #tpu.memory_space<vmem>>, vector<1x128xf32>
      %14 = vector.broadcast %13 : vector<1x128xf32> to vector<128x128xf32>
      %15 = arith.addf %12, %14 : vector<128x128xf32>
      %c0_13 = arith.constant 0 : index
      %c0_14 = arith.constant 0 : index
      %16 = vector.load %arg8[%c0_13, %c0_14] : memref<128x128xf32, #tpu.memory_space<vmem>>, vector<128x128xf32>
      tpu.vector_store %arg8[%c0_13, %c0_14], %15 {strides = array<i32>} : memref<128x128xf32, #tpu.memory_space<vmem>>, vector<128x128xf32>,
      %c0_15 = arith.constant 0 : index
      %c0_16 = arith.constant 0 : index
      %17 = vector.load %arg8[%c0_15, %c0_16] : memref<128x128xf32, #tpu.memory_space<vmem>>, vector<128x128xf32>
      %18 = arith.truncf %17 : vector<128x128xf32> to vector<128x128xbf16>
      %c0_17 = arith.constant 0 : index
      %c0_18 = arith.constant 0 : index
      %19 = vector.load %arg5[%c0_17, %c0_18] : memref<128x512xbf16, #tpu.memory_space<vmem>>, vector<128x512xbf16>
      %cst_19 = arith.constant dense<0.000000e+00> : vector<128x512xf32>
      %20 = tpu.matmul %18, %19, %cst_19 {dimension_numbers = #tpu.dot_dimension_numbers<[1], [0], [0], [1], [0, 0, 1, 1], [], []>} : vector<128x128xbf16>, vector<128x512xbf16>, vector<128x512xf32> -> vector<128x512xf32>
      %c0_20 = arith.constant 0 : index
      %c0_21 = arith.constant 0 : index
      %21 = vector.load %arg6[%c0_20, %c0_21] : memref<1x512xf32, #tpu.memory_space<vmem>>, vector<1x512xf32>
      %22 = vector.broadcast %21 : vector<1x512xf32> to vector<128x512xf32>
      %23 = arith.addf %20, %22 : vector<128x512xf32>
      %c0_22 = arith.constant 0 : index
      %c0_23 = arith.constant 0 : index
      %24 = vector.load %arg7[%c0_22, %c0_23] : memref<128x512xf32, #tpu.memory_space<vmem>>, vector<128x512xf32>
      tpu.vector_store %arg7[%c0_22, %c0_23], %23 {strides = array<i32>} : memref<128x512xf32, #tpu.memory_space<vmem>>, vector<128x512xf32>,
    } else {
    }
    return
  }
  func.func @transform_0(%arg0: i32, %arg1: i32) -> (i32, i32) {
    %c0_i32 = arith.constant 0 : i32
    return %arg0, %arg1 : i32, i32
  }
  func.func @transform_1(%arg0: i32, %arg1: i32) -> (i32, i32) {
    %c0_i32 = arith.constant 0 : i32
    %c0_i32_0 = arith.constant 0 : i32
    return %arg1, %c0_i32 : i32, i32
  }
  func.func @transform_2(%arg0: i32, %arg1: i32) -> (i32, i32) {
    %c0_i32 = arith.constant 0 : i32
    %c0_i32_0 = arith.constant 0 : i32
    %c0_i32_1 = arith.constant 0 : i32
    return %c0_i32, %c0_i32_0 : i32, i32
  }
  func.func @transform_3(%arg0: i32, %arg1: i32) -> (i32, i32) {
    %c0_i32 = arith.constant 0 : i32
    %c0_i32_0 = arith.constant 0 : i32
    %c0_i32_1 = arith.constant 0 : i32
    return %c0_i32, %c0_i32_0 : i32, i32
  }
  func.func @transform_4(%arg0: i32, %arg1: i32) -> (i32, i32) {
    %c0_i32 = arith.constant 0 : i32
    %c0_i32_0 = arith.constant 0 : i32
    %c0_i32_1 = arith.constant 0 : i32
    return %c0_i32, %c0_i32_0 : i32, i32
  }
  func.func @transform_5(%arg0: i32, %arg1: i32) -> (i32, i32) {
    %c0_i32 = arith.constant 0 : i32
    %c0_i32_0 = arith.constant 0 : i32
    return %arg0, %c0_i32 : i32, i32
  }
}

</mosaic_0001>

<llo_original>
// kernel: tpu_custom_call.1
$region0: #{tpu_custom_call.1}
  #allocation0 [shape = 'u32[]', space=smem, size = 0x4, offset = 0x4, fixed_abs, tag = 'smem constant byte address 0x4 - core index']
  #allocation1 [shape = 'u32[144,128]{1,0:T(1,128)}', space=vmem, size = 0x12000, scoped, tag = 'internal scratch']
  #allocation2 [shape = 'f32[128,128]{1,0:T(8,128)}', space=vmem, size = 0x10000, scoped, tag = 'scratch operand']
  %s0 = inlined_call_operand.hbm [shape: bf16[256,512], index: 0, kind: input, shape index: {}]
  %s1 = inlined_call_operand.hbm [shape: bf16[512,128], index: 1, kind: input, shape index: {}]
  %s2 = inlined_call_operand.vmem [shape: f32[1,128], index: 2, kind: input, shape index: {}]
  %s3 = inlined_call_operand.hbm [shape: bf16[128,512], index: 3, kind: input, shape index: {}]
  %s4 = inlined_call_operand.vmem [shape: f32[1,512], index: 4, kind: input, shape index: {}]
  %s5 = inlined_call_operand.hbm [shape: f32[256,512], index: 5, kind: output, shape index: {}]
  %s6 = sld [smem:[#allocation0]]
  $region73: #{tpu_custom_call.1} parent=0
    _
  %s8 = ssub.s32 1, %s6
  %s9 = scalar_select 0, %s8, %s6
  $region1: #{tpu_custom_call.1} parent=0
    #allocation3 [shape = 'u8[65536]{0}', space=vmem, size = 0x10000, scoped, tag = 'input window, operand 0']
    #allocation4 [shape = 's32[2]{0}', space=sflag, size = 0x8, scoped, tag = 'scoped memory for tpu_custom_call.1']
    #allocation5 [shape = 's32[2]{0}', space=sflag, size = 0x8, scoped, tag = 'scoped memory for tpu_custom_call.1']
    #allocation6 [shape = 'u8[65536]{0}', space=vmem, size = 0x10000, scoped, tag = 'input window, operand 1']
    #allocation7 [shape = 's32[2]{0}', space=sflag, size = 0x8, scoped, tag = 'scoped memory for tpu_custom_call.1']
    #allocation8 [shape = 'u8[131072]{0}', space=vmem, size = 0x20000, scoped, tag = 'input window, operand 3, single buffered']
    #allocation9 [shape = 'u8[524288]{0}', space=vmem, size = 0x80000, scoped, tag = 'output window, operand 0']
    %10 = vsyncpa [#allocation4], 0
    %s11 = scalar_lea.sflag [#allocation4], 1
    %12 = vsyncpa %s11, 0
    %13 = vsyncpa [#allocation7], 0
    %s14 = scalar_lea.sflag [#allocation7], 1
    %15 = vsyncpa %s14, 0
    %16 = vsyncpa [#allocation5], 0
    %s17 = scalar_lea.sflag [#allocation5], 1
    %18 = vsyncpa %s17, 0
    loop: start=0, step=1, limit=10
    $region2: #{tpu_custom_call.1} parent=1 // loop_pre_header
      _
    $region3: #{tpu_custom_call.1} parent=1 // loop_header
      %s20 = sphi 0, %s24
      %p21 = scmp.ge.s32.totalorder %s20, 10
      %s27 = sphi 0, %s39
      %s28 = sphi 0, %s35
      %s29 = sphi 0, %s27
      %s30 = sphi 0, %s28
      %s31 = sphi 0, %s29
      %s32 = sphi 0, %s30
      %s44 = sphi 0, %s46
      %s47 = sphi 0, %s44
      %s48 = sphi 0, %s47
      %s64 = sphi 0, %s48
      %s70 = sphi 0, %s72
      %s73 = sphi 0, %s70
      %s74 = sphi 0, %s73
      %s90 = sphi 0, %s74
      %s94 = sphi 0, %s94
      %s96 = sphi 0, %s94
      %s97 = sphi 0, %s96
      %s111 = sphi 0, %s97
      %s115 = sphi 0, %s115
      %s117 = sphi 0, %s115
      %s118 = sphi 0, %s117
      %s132 = sphi 0, %s118
      %s136 = sphi 0, %s136
      %s138 = sphi 0, %s136
      %s139 = sphi 0, %s138
      %s153 = sphi 0, %s139
      %s159 = sphi 0, %s161
      %s162 = sphi 0, %s159
      %s163 = sphi 0, %s162
      %s179 = sphi 0, %s163
    $region4: #{tpu_custom_call.1} parent=1 // loop_header_branch
      %23 = sbr.rel (%p21) target = $region8
    $region5: #{tpu_custom_call.1} parent=1 // loop_body
      %s25 = ssub.s32 %s20, 1
      %s26 = ssub.s32 %s20, 2
      %s33 = sadd.s32 1, %s28
      %p34 = scmp.ge.s32.totalorder %s33, 4
      %s35 = scalar_select %p34, 0, %s33
      %s36 = sadd.s32 1, %s27
      %s37 = scalar_select %p34, %s36, %s27
      %p38 = scmp.ge.s32.totalorder %s37, 2
      %s39 = scalar_select %p38, 0, %s37
      %s40 = ssub.s32 %s27, %s39
      %s41 = ssub.s32 %s28, %s35
      %s42 = sor.u32 %s40, %s41
      %p43 = scmp.eq.s32.totalorder %s42, 0
      %s45 = sadd.s32 %s44, 1
      %s46 = scalar_select %p43, %s44, %s45
      %p49 = pneg %p43
      %p50 = scmp.eq.s32.totalorder %s20, 7
      %p51 = por %p49, %p50
      %p52 = scmp.ne.s32.totalorder %s44, %s47
      %p53 = scmp.eq.s32.totalorder %s20, 0
      %p54 = por %p52, %p53
      %p55 = scmp.ne.s32.totalorder %s44, %s47
      %p56 = scmp.eq.s32.totalorder %s25, 7
      %p57 = por %p55, %p56
      %p58 = scmp.ne.s32.totalorder %s47, %s48
      %p59 = scmp.eq.s32.totalorder %s25, 0
      %p60 = por %p58, %p59
      %p61 = scmp.ne.s32.totalorder %s47, %s48
      %p62 = scmp.eq.s32.totalorder %s26, 7
      %p63 = por %p61, %p62
      %p65 = scmp.ne.s32.totalorder %s48, %s64
      %p66 = scmp.eq.s32.totalorder %s26, 0
      %p67 = por %p65, %p66
      %s68 = ssub.s32 %s28, %s35
      %p69 = scmp.eq.s32.totalorder %s68, 0
      %s71 = sadd.s32 %s70, 1
      %s72 = scalar_select %p69, %s70, %s71
      %p75 = pneg %p69
      %p76 = scmp.eq.s32.totalorder %s20, 7
      %p77 = por %p75, %p76
      %p78 = scmp.ne.s32.totalorder %s70, %s73
      %p79 = scmp.eq.s32.totalorder %s20, 0
      %p80 = por %p78, %p79
      %p81 = scmp.ne.s32.totalorder %s70, %s73
      %p82 = scmp.eq.s32.totalorder %s25, 7
      %p83 = por %p81, %p82
      %p84 = scmp.ne.s32.totalorder %s73, %s74
      %p85 = scmp.eq.s32.totalorder %s25, 0
      %p86 = por %p84, %p85
      %p87 = scmp.ne.s32.totalorder %s73, %s74
      %p88 = scmp.eq.s32.totalorder %s26, 7
      %p89 = por %p87, %p88
      %p91 = scmp.ne.s32.totalorder %s74, %s90
      %p92 = scmp.eq.s32.totalorder %s26, 0
      %p93 = por %p91, %p92
      %s95 = sadd.s32 %s94, 1
      %p98 = scmp.eq.s32.totalorder %s20, 7
      %p99 = scmp.ne.s32.totalorder %s94, %s96
      %p100 = scmp.eq.s32.totalorder %s20, 0
      %p101 = por %p99, %p100
      %p102 = scmp.ne.s32.totalorder %s94, %s96
      %p103 = scmp.eq.s32.totalorder %s25, 7
      %p104 = por %p102, %p103
      %p105 = scmp.ne.s32.totalorder %s96, %s97
      %p106 = scmp.eq.s32.totalorder %s25, 0
      %p107 = por %p105, %p106
      %p108 = scmp.ne.s32.totalorder %s96, %s97
      %p109 = scmp.eq.s32.totalorder %s26, 7
      %p110 = por %p108, %p109
      %p112 = scmp.ne.s32.totalorder %s97, %s111
      %p113 = scmp.eq.s32.totalorder %s26, 0
      %p114 = por %p112, %p113
      %s116 = sadd.s32 %s115, 1
      %p119 = scmp.eq.s32.totalorder %s20, 7
      %p120 = scmp.ne.s32.totalorder %s115, %s117
      %p121 = scmp.eq.s32.totalorder %s20, 0
      %p122 = por %p120, %p121
      %p123 = scmp.ne.s32.totalorder %s115, %s117
      %p124 = scmp.eq.s32.totalorder %s25, 7
      %p125 = por %p123, %p124
      %p126 = scmp.ne.s32.totalorder %s117, %s118
      %p127 = scmp.eq.s32.totalorder %s25, 0
      %p128 = por %p126, %p127
      %p129 = scmp.ne.s32.totalorder %s117, %s118
      %p130 = scmp.eq.s32.totalorder %s26, 7
      %p131 = por %p129, %p130
      %p133 = scmp.ne.s32.totalorder %s118, %s132
      %p134 = scmp.eq.s32.totalorder %s26, 0
      %p135 = por %p133, %p134
      %s137 = sadd.s32 %s136, 1
      %p140 = scmp.eq.s32.totalorder %s20, 7
      %p141 = scmp.ne.s32.totalorder %s136, %s138
      %p142 = scmp.eq.s32.totalorder %s20, 0
      %p143 = por %p141, %p142
      %p144 = scmp.ne.s32.totalorder %s136, %s138
      %p145 = scmp.eq.s32.totalorder %s25, 7
      %p146 = por %p144, %p145
      %p147 = scmp.ne.s32.totalorder %s138, %s139
      %p148 = scmp.eq.s32.totalorder %s25, 0
      %p149 = por %p147, %p148
      %p150 = scmp.ne.s32.totalorder %s138, %s139
      %p151 = scmp.eq.s32.totalorder %s26, 7
      %p152 = por %p150, %p151
      %p154 = scmp.ne.s32.totalorder %s139, %s153
      %p155 = scmp.eq.s32.totalorder %s26, 0
      %p156 = por %p154, %p155
      %s157 = ssub.s32 %s27, %s39
      %p158 = scmp.eq.s32.totalorder %s157, 0
      %s160 = sadd.s32 %s159, 1
      %s161 = scalar_select %p158, %s159, %s160
      %p164 = pneg %p158
      %p165 = scmp.eq.s32.totalorder %s20, 7
      %p166 = por %p164, %p165
      %p167 = scmp.ne.s32.totalorder %s159, %s162
      %p168 = scmp.eq.s32.totalorder %s20, 0
      %p169 = por %p167, %p168
      %p170 = scmp.ne.s32.totalorder %s159, %s162
      %p171 = scmp.eq.s32.totalorder %s25, 7
      %p172 = por %p170, %p171
      %p173 = scmp.ne.s32.totalorder %s162, %s163
      %p174 = scmp.eq.s32.totalorder %s25, 0
      %p175 = por %p173, %p174
      %p176 = scmp.ne.s32.totalorder %s162, %s163
      %p177 = scmp.eq.s32.totalorder %s26, 7
      %p178 = por %p176, %p177
      %p180 = scmp.ne.s32.totalorder %s163, %s179
      %p181 = scmp.eq.s32.totalorder %s26, 0
      %p182 = por %p180, %p181
      %p183 = scmp.le.s32.totalorder 1, %s20
      %p184 = scmp.lt.s32.totalorder %s20, 9
      %p185 = pnand %p183, %p184
      %p186 = pneg %p185
      // Predicated region
      $region9: #{tpu_custom_call.1} parent=5 // pred_check
        _
      $region10: #{tpu_custom_call.1} parent=5 // pred_check_branch
        %188 = sbr.rel (%p185) target = $region12
      $region11: #{tpu_custom_call.1} parent=5 // pred_region
        %s189 = ssub.s32 %s20, 1
        // Predicated region
        $region13: #{tpu_custom_call.1} parent=11 // pred_check
          %p190 = pneg %p107
        $region14: #{tpu_custom_call.1} parent=11 // pred_check_branch
          %192 = sbr.rel (%p190) target = $region16
        $region15: #{tpu_custom_call.1} parent=11 // pred_region
          _
        $region16: #{tpu_custom_call.1} parent=11 // pred_fallthru
          _
        // Predicated region
        $region17: #{tpu_custom_call.1} parent=11 // pred_check
          %p193 = pneg %p128
        $region18: #{tpu_custom_call.1} parent=11 // pred_check_branch
          %195 = sbr.rel (%p193) target = $region20
        $region19: #{tpu_custom_call.1} parent=11 // pred_region
          %s197 = ssub.s32 4096, 4096
          %198 = vsyncadd [#allocation7], %s197
          %s199 = sshll.u32 [#allocation8], 4
          %s200 = int_to_ptr.vmem [resolvable:$true] %s199
          %205 = dma.hbm_to_vmem [thread:$0]  %s3, 4096, %s200, [#allocation7], 256, 256, 16
        $region20: #{tpu_custom_call.1} parent=11 // pred_fallthru
          _
        // Predicated region
        $region21: #{tpu_custom_call.1} parent=11 // pred_check
          %p206 = pneg %p149
        $region22: #{tpu_custom_call.1} parent=11 // pred_check_branch
          %208 = sbr.rel (%p206) target = $region24
        $region23: #{tpu_custom_call.1} parent=11 // pred_region
          _
        $region24: #{tpu_custom_call.1} parent=11 // pred_fallthru
          _
      $region12: #{tpu_custom_call.1} parent=5 // pred_fallthru
        _
      %p209 = scmp.lt.s32.totalorder %s20, 8
      // Predicated region
      $region25: #{tpu_custom_call.1} parent=5 // pred_check
        %p210 = pneg %p209
      $region26: #{tpu_custom_call.1} parent=5 // pred_check_branch
        %212 = sbr.rel (%p210) target = $region28
      $region27: #{tpu_custom_call.1} parent=5 // pred_region
        // Predicated region
        $region29: #{tpu_custom_call.1} parent=27 // pred_check
          %p213 = pneg %p54
        $region30: #{tpu_custom_call.1} parent=27 // pred_check_branch
          %215 = sbr.rel (%p213) target = $region32
        $region31: #{tpu_custom_call.1} parent=27 // pred_region
          %s216 = sand.u32 %s44, 1
          %s217 = scalar_lea.sflag [#allocation4], %s216
          %s218 = sand.u32 %s44, 1
          %s219 = smul.addr %s218, 64
          %s220 = scalar_lea.vmem [#allocation3], %s219
          %s221 = smul.u32 16, %s27
          %s223 = ssub.s32 1024, 1024
          %224 = vsyncadd %s217, %s223
          %s225 = smul.addr %s221, 4
          %s226 = sadd.s32 %s28, %s225
          %s227 = smul.addr %s226, 64
          %s228 = scalar_lea.hbm %s0, %s227
          %s229 = sshll.u32 %s220, 4
          %s230 = int_to_ptr.vmem [resolvable:$true] %s229
          %235 = dma.hbm_to_vmem [thread:$0]  %s228, 1024, %s230, %s217, 256, 64, 4
        $region32: #{tpu_custom_call.1} parent=27 // pred_fallthru
          _
        // Predicated region
        $region33: #{tpu_custom_call.1} parent=27 // pred_check
          %p236 = pneg %p80
        $region34: #{tpu_custom_call.1} parent=27 // pred_check_branch
          %238 = sbr.rel (%p236) target = $region36
        $region35: #{tpu_custom_call.1} parent=27 // pred_region
          %s239 = sand.u32 %s20, 1
          %s240 = scalar_lea.sflag [#allocation7], %s239
          %s241 = sand.u32 %s70, 1
          %s242 = smul.addr %s241, 64
          %s243 = scalar_lea.vmem [#allocation6], %s242
          %s244 = smul.u32 16, %s28
          %s246 = ssub.s32 1024, 1024
          %247 = vsyncadd %s240, %s246
          %s248 = smul.addr %s244, 64
          %s249 = scalar_lea.hbm %s1, %s248
          %s250 = sshll.u32 %s243, 4
          %s251 = int_to_ptr.vmem [resolvable:$true] %s250
          %256 = dma.hbm_to_vmem [thread:$0]  %s249, 1024, %s251, %s240, 64, 64, 4
        $region36: #{tpu_custom_call.1} parent=27 // pred_fallthru
          _
      $region28: #{tpu_custom_call.1} parent=5 // pred_fallthru
        _
      %p257 = scmp.le.s32.totalorder 1, %s20
      %p258 = scmp.lt.s32.totalorder %s20, 9
      %p259 = pnand %p257, %p258
      %p260 = pneg %p259
      // Predicated region
      $region37: #{tpu_custom_call.1} parent=5 // pred_check
        _
      $region38: #{tpu_custom_call.1} parent=5 // pred_check_branch
        %262 = sbr.rel (%p259) target = $region40
      $region39: #{tpu_custom_call.1} parent=5 // pred_region
        %s263 = ssub.s32 %s20, 1
        %s264 = sand.u32 %s47, 1
        %s265 = scalar_lea.sflag [#allocation4], %s264
        %s266 = sand.u32 %s47, 1
        %s267 = smul.addr %s266, 64
        %s268 = scalar_lea.vmem [#allocation3], %s267
        // Predicated region
        $region41: #{tpu_custom_call.1} parent=39 // pred_check
          %p269 = pneg %p60
        $region42: #{tpu_custom_call.1} parent=39 // pred_check_branch
          %271 = sbr.rel (%p269) target = $region44
        $region43: #{tpu_custom_call.1} parent=39 // pred_region
          %272 = dma.done %s265, 1024
        $region44: #{tpu_custom_call.1} parent=39 // pred_fallthru
          _
        %s273 = sand.u32 %s25, 1
        %s274 = scalar_lea.sflag [#allocation7], %s273
        %s275 = sand.u32 %s73, 1
        %s276 = smul.addr %s275, 64
        %s277 = scalar_lea.vmem [#allocation6], %s276
        // Predicated region
        $region45: #{tpu_custom_call.1} parent=39 // pred_check
          %p278 = pneg %p86
        $region46: #{tpu_custom_call.1} parent=39 // pred_check_branch
          %280 = sbr.rel (%p278) target = $region48
        $region47: #{tpu_custom_call.1} parent=39 // pred_region
          %281 = dma.done %s274, 1024
        $region48: #{tpu_custom_call.1} parent=39 // pred_fallthru
          _
        // Predicated region
        $region49: #{tpu_custom_call.1} parent=39 // pred_check
          %p282 = pneg %p128
        $region50: #{tpu_custom_call.1} parent=39 // pred_check_branch
          %284 = sbr.rel (%p282) target = $region52
        $region51: #{tpu_custom_call.1} parent=39 // pred_region
          %285 = dma.done [#allocation7], 4096
        $region52: #{tpu_custom_call.1} parent=39 // pred_fallthru
          _
        %s286 = sand.u32 %s47, 1
        %s287 = scalar_lea.sflag [#allocation4], %s286
        %s288 = sand.u32 %s47, 1
        %s289 = smul.addr %s288, 64
        %s290 = scalar_lea.vmem [#allocation3], %s289
        %p291 = pneg %p60
        %p292 = pneg %p57
        %s293 = sand.u32 %s25, 1
        %s294 = scalar_lea.sflag [#allocation7], %s293
        %s295 = sand.u32 %s73, 1
        %s296 = smul.addr %s295, 64
        %s297 = scalar_lea.vmem [#allocation6], %s296
        %p298 = pneg %p86
        %p299 = pneg %p83
        %p300 = pneg %p107
        %p301 = pneg %p104
        %p302 = pneg %p128
        %p303 = pneg %p125
        %p304 = pneg %p149
        %p305 = pneg %p146
        %p306 = pneg %p175
        %p307 = pneg %p172
        %s308 = sand.u32 %s162, 1
        %s309 = scalar_lea.sflag [#allocation5], %s308
        %s310 = sand.u32 %s162, 1
        %s311 = smul.addr %s310, 512
        %s312 = scalar_lea.vmem [#allocation9], %s311
        %s313 = smul.u32 16, %s29
        %s314 = smul.u32 16, %s30
        %s315 = smul.u32 16, %s29
        %p317 = scmp.eq.s32.totalorder %s30, 0
        // Predicated region
        $region53: #{tpu_custom_call.1} parent=39 // pred_check
          %p318 = pneg %p317
        $region54: #{tpu_custom_call.1} parent=39 // pred_check_branch
          %320 = sbr.rel (%p318) target = $region56
        $region55: #{tpu_custom_call.1} parent=39 // pred_region
          %321 = vst [vmem:[#allocation2] sm:$0xff] 0.0
          %322 = vst [vmem:[#allocation2 + $0x8] sm:$0xff] 0.0
          %323 = vst [vmem:[#allocation2 + $0x10] sm:$0xff] 0.0
          %324 = vst [vmem:[#allocation2 + $0x18] sm:$0xff] 0.0
          %325 = vst [vmem:[#allocation2 + $0x20] sm:$0xff] 0.0
          %326 = vst [vmem:[#allocation2 + $0x28] sm:$0xff] 0.0
          %327 = vst [vmem:[#allocation2 + $0x30] sm:$0xff] 0.0
          %328 = vst [vmem:[#allocation2 + $0x38] sm:$0xff] 0.0
          %329 = vst [vmem:[#allocation2 + $0x40] sm:$0xff] 0.0
          %330 = vst [vmem:[#allocation2 + $0x48] sm:$0xff] 0.0
          %331 = vst [vmem:[#allocation2 + $0x50] sm:$0xff] 0.0
          %332 = vst [vmem:[#allocation2 + $0x58] sm:$0xff] 0.0
          %333 = vst [vmem:[#allocation2 + $0x60] sm:$0xff] 0.0
          %334 = vst [vmem:[#allocation2 + $0x68] sm:$0xff] 0.0
          %335 = vst [vmem:[#allocation2 + $0x70] sm:$0xff] 0.0
          %336 = vst [vmem:[#allocation2 + $0x78] sm:$0xff] 0.0
        $region56: #{tpu_custom_call.1} parent=39 // pred_fallthru
          _
        %v337 = vld [vmem:[#allocation2] sm:$0xff]
        %v338 = vld [vmem:[#allocation2 + $0x8] sm:$0xff]
        %v339 = vld [vmem:[#allocation2 + $0x10] sm:$0xff]
        %v340 = vld [vmem:[#allocation2 + $0x18] sm:$0xff]
        %v341 = vld [vmem:[#allocation2 + $0x20] sm:$0xff]
        %v342 = vld [vmem:[#allocation2 + $0x28] sm:$0xff]
        %v343 = vld [vmem:[#allocation2 + $0x30] sm:$0xff]
        %v344 = vld [vmem:[#allocation2 + $0x38] sm:$0xff]
        %v345 = vld [vmem:[#allocation2 + $0x40] sm:$0xff]
        %v346 = vld [vmem:[#allocation2 + $0x48] sm:$0xff]
        %v347 = vld [vmem:[#allocation2 + $0x50] sm:$0xff]
        %v348 = vld [vmem:[#allocation2 + $0x58] sm:$0xff]
        %v349 = vld [vmem:[#allocation2 + $0x60] sm:$0xff]
        %v350 = vld [vmem:[#allocation2 + $0x68] sm:$0xff]
        %v351 = vld [vmem:[#allocation2 + $0x70] sm:$0xff]
        %v352 = vld [vmem:[#allocation2 + $0x78] sm:$0xff]
        %v353 = vld [vmem:[%s268] sm:$0xf]
        %v354 = vld [vmem:[%s268 + $0x4] sm:$0xf]
        %v355 = vld [vmem:[%s268 + $0x8] sm:$0xf]
        %v356 = vld [vmem:[%s268 + $0xc] sm:$0xf]
        %v357 = vld [vmem:[%s268 + $0x10] sm:$0xf]
        %v358 = vld [vmem:[%s268 + $0x14] sm:$0xf]
        %v359 = vld [vmem:[%s268 + $0x18] sm:$0xf]
        %v360 = vld [vmem:[%s268 + $0x1c] sm:$0xf]
        %v361 = vld [vmem:[%s268 + $0x20] sm:$0xf]
        %v362 = vld [vmem:[%s268 + $0x24] sm:$0xf]
        %v363 = vld [vmem:[%s268 + $0x28] sm:$0xf]
        %v364 = vld [vmem:[%s268 + $0x2c] sm:$0xf]
        %v365 = vld [vmem:[%s268 + $0x30] sm:$0xf]
        %v366 = vld [vmem:[%s268 + $0x34] sm:$0xf]
        %v367 = vld [vmem:[%s268 + $0x38] sm:$0xf]
        %v368 = vld [vmem:[%s268 + $0x3c] sm:$0xf]
        %v369 = vld [vmem:[%s277] sm:$0xf]
        %v370 = vld [vmem:[%s277 + $0x4] sm:$0xf]
        %v371 = vld [vmem:[%s277 + $0x8] sm:$0xf]
        %v372 = vld [vmem:[%s277 + $0xc] sm:$0xf]
        %v373 = vld [vmem:[%s277 + $0x10] sm:$0xf]
        %v374 = vld [vmem:[%s277 + $0x14] sm:$0xf]
        %v375 = vld [vmem:[%s277 + $0x18] sm:$0xf]
        %v376 = vld [vmem:[%s277 + $0x1c] sm:$0xf]
        %v377 = vld [vmem:[%s277 + $0x20] sm:$0xf]
        %v378 = vld [vmem:[%s277 + $0x24] sm:$0xf]
        %v379 = vld [vmem:[%s277 + $0x28] sm:$0xf]
        %v380 = vld [vmem:[%s277 + $0x2c] sm:$0xf]
        %v381 = vld [vmem:[%s277 + $0x30] sm:$0xf]
        %v382 = vld [vmem:[%s277 + $0x34] sm:$0xf]
        %v383 = vld [vmem:[%s277 + $0x38] sm:$0xf]
        %v384 = vld [vmem:[%s277 + $0x3c] sm:$0xf]
        %v401 = vunpack.c.l.b16 %v353
        %v402 = vunpack.c.l.b16 %v354
        %v403 = vunpack.c.l.b16 %v355
        %v404 = vunpack.c.l.b16 %v356
        %v405 = vunpack.c.l.b16 %v357
        %v406 = vunpack.c.l.b16 %v358
        %v407 = vunpack.c.l.b16 %v359
        %v408 = vunpack.c.l.b16 %v360
        %v409 = vunpack.c.l.b16 %v361
        %v410 = vunpack.c.l.b16 %v362
        %v411 = vunpack.c.l.b16 %v363
        %v412 = vunpack.c.l.b16 %v364
        %v413 = vunpack.c.l.b16 %v365
        %v414 = vunpack.c.l.b16 %v366
        %v415 = vunpack.c.l.b16 %v367
        %v416 = vunpack.c.l.b16 %v368
        %v417 = vpack.c.b16 %v402, %v401
        %v418 = vpack.c.b16 %v404, %v403
        %v419 = vpack.c.b16 %v406, %v405
        %v420 = vpack.c.b16 %v408, %v407
        %v421 = vpack.c.b16 %v410, %v409
        %v422 = vpack.c.b16 %v412, %v411
        %v423 = vpack.c.b16 %v414, %v413
        %v424 = vpack.c.b16 %v416, %v415
        %v449 = vunpack.c.l.b16 %v369
        %v450 = vunpack.c.l.b16 %v370
        %v451 = vunpack.c.l.b16 %v371
        %v452 = vunpack.c.l.b16 %v372
        %v453 = vunpack.c.l.b16 %v373
        %v454 = vunpack.c.l.b16 %v374
        %v455 = vunpack.c.l.b16 %v375
        %v456 = vunpack.c.l.b16 %v376
        %v457 = vunpack.c.l.b16 %v377
        %v458 = vunpack.c.l.b16 %v378
        %v459 = vunpack.c.l.b16 %v379
        %v460 = vunpack.c.l.b16 %v380
        %v461 = vunpack.c.l.b16 %v381
        %v462 = vunpack.c.l.b16 %v382
        %v463 = vunpack.c.l.b16 %v383
        %v464 = vunpack.c.l.b16 %v384
        %v465 = vpack.c.b16 %v450, %v449
        %v466 = vpack.c.b16 %v452, %v451
        %v467 = vpack.c.b16 %v454, %v453
        %v468 = vpack.c.b16 %v456, %v455
        %v469 = vpack.c.b16 %v458, %v457
        %v470 = vpack.c.b16 %v460, %v459
        %v471 = vpack.c.b16 %v462, %v461
        %v472 = vpack.c.b16 %v464, %v463
        %481 = vmatprep.subr.bf16.mxu0 0
        %482 = vmatpush1.bf16.msra.mxu0 %v472
        %483 = vmatprep.subr.bf16.mxu0 0
        %484 = vmatpush1.bf16.msra.mxu0 %v471
        %485 = vmatprep.subr.bf16.mxu0 0
        %486 = vmatpush1.bf16.msra.mxu0 %v470
        %487 = vmatprep.subr.bf16.mxu0 0
        %488 = vmatpush1.bf16.msra.mxu0 %v469
        %489 = vmatprep.subr.bf16.mxu0 0
        %490 = vmatpush1.bf16.msra.mxu0 %v468
        %491 = vmatprep.subr.bf16.mxu0 0
        %492 = vmatpush1.bf16.msra.mxu0 %v467
        %493 = vmatprep.subr.bf16.mxu0 0
        %494 = vmatpush1.bf16.msra.mxu0 %v466
        %495 = vmatprep.subr.bf16.mxu0 0
        %496 = vmatpush1.bf16.msra.mxu0 %v465
        %497 = vmatprep.subr.bf16.mxu0 0
        %498 = vmatpush2.bf16.msra.mxu0 0
        %499 = vmatprep.subr.bf16.mxu0 0
        %500 = vmatpush2.bf16.msra.mxu0 0
        %501 = vmatprep.subr.bf16.mxu0 0
        %502 = vmatpush2.bf16.msra.mxu0 0
        %503 = vmatprep.subr.bf16.mxu0 0
        %504 = vmatpush2.bf16.msra.mxu0 0
        %505 = vmatprep.subr.bf16.mxu0 0
        %506 = vmatpush2.bf16.msra.mxu0 0
        %507 = vmatprep.subr.bf16.mxu0 0
        %508 = vmatpush2.bf16.msra.mxu0 0
        %509 = vmatprep.subr.bf16.mxu0 0
        %510 = vmatpush2.bf16.msra.mxu0 0
        %511 = vmatprep.subr.bf16.mxu0 0
        %512 = vmatpush2.bf16.msra.mxu0 0
        %513 = vmatprep.mubr.bf16.mxu0 0
        %514 = vmatmul.mubr.bf16.gmra.mxu0 %v417
        %v515 = vpop.f32.mrf.mxu0
        %v516 = vadd.f32 0.0, %v515
        %v517 = vpop.f32.mrf.mxu0
        %v518 = vpop.f32.mrf.mxu0
        %v519 = vadd.f32 0.0, %v518
        %v520 = vpop.f32.mrf.mxu0
        %521 = vmatprep.mubr.bf16.mxu0 0
        %522 = vmatmul.mubr.bf16.gmra.mxu0 %v418
        %v523 = vpop.f32.mrf.mxu0
        %v524 = vadd.f32 0.0, %v523
        %v525 = vpop.f32.mrf.mxu0
        %v526 = vpop.f32.mrf.mxu0
        %v527 = vadd.f32 0.0, %v526
        %v528 = vpop.f32.mrf.mxu0
        %529 = vmatprep.mubr.bf16.mxu0 0
        %530 = vmatmul.mubr.bf16.gmra.mxu0 %v419
        %v531 = vpop.f32.mrf.mxu0
        %v532 = vadd.f32 0.0, %v531
        %v533 = vpop.f32.mrf.mxu0
        %v534 = vpop.f32.mrf.mxu0
        %v535 = vadd.f32 0.0, %v534
        %v536 = vpop.f32.mrf.mxu0
        %537 = vmatprep.mubr.bf16.mxu0 0
        %538 = vmatmul.mubr.bf16.gmra.mxu0 %v420
        %v539 = vpop.f32.mrf.mxu0
        %v540 = vadd.f32 0.0, %v539
        %v541 = vpop.f32.mrf.mxu0
        %v542 = vpop.f32.mrf.mxu0
        %v543 = vadd.f32 0.0, %v542
        %v544 = vpop.f32.mrf.mxu0
        %545 = vmatprep.mubr.bf16.mxu0 0
        %546 = vmatmul.mubr.bf16.gmra.mxu0 %v421
        %v547 = vpop.f32.mrf.mxu0
        %v548 = vadd.f32 0.0, %v547
        %v549 = vpop.f32.mrf.mxu0
        %v550 = vpop.f32.mrf.mxu0
        %v551 = vadd.f32 0.0, %v550
        %v552 = vpop.f32.mrf.mxu0
        %553 = vmatprep.mubr.bf16.mxu0 0
        %554 = vmatmul.mubr.bf16.gmra.mxu0 %v422
        %v555 = vpop.f32.mrf.mxu0
        %v556 = vadd.f32 0.0, %v555
        %v557 = vpop.f32.mrf.mxu0
        %v558 = vpop.f32.mrf.mxu0
        %v559 = vadd.f32 0.0, %v558
        %v560 = vpop.f32.mrf.mxu0
        %561 = vmatprep.mubr.bf16.mxu0 0
        %562 = vmatmul.mubr.bf16.gmra.mxu0 %v423
        %v563 = vpop.f32.mrf.mxu0
        %v564 = vadd.f32 0.0, %v563
        %v565 = vpop.f32.mrf.mxu0
        %v566 = vpop.f32.mrf.mxu0
        %v567 = vadd.f32 0.0, %v566
        %v568 = vpop.f32.mrf.mxu0
        %569 = vmatprep.mubr.bf16.mxu0 0
        %570 = vmatmul.mubr.bf16.gmra.mxu0 %v424
        %v571 = vpop.f32.mrf.mxu0
        %v572 = vadd.f32 0.0, %v571
        %v573 = vpop.f32.mrf.mxu0
        %v574 = vpop.f32.mrf.mxu0
        %v575 = vadd.f32 0.0, %v574
        %v576 = vpop.f32.mrf.mxu0
        %577 = vdwg.mxu0
        %v578 = vadd.f32 %v337, %v516
        %v579 = vadd.f32 %v338, %v519
        %v580 = vadd.f32 %v339, %v524
        %v581 = vadd.f32 %v340, %v527
        %v582 = vadd.f32 %v341, %v532
        %v583 = vadd.f32 %v342, %v535
        %v584 = vadd.f32 %v343, %v540
        %v585 = vadd.f32 %v344, %v543
        %v586 = vadd.f32 %v345, %v548
        %v587 = vadd.f32 %v346, %v551
        %v588 = vadd.f32 %v347, %v556
        %v589 = vadd.f32 %v348, %v559
        %v590 = vadd.f32 %v349, %v564
        %v591 = vadd.f32 %v350, %v567
        %v592 = vadd.f32 %v351, %v572
        %v593 = vadd.f32 %v352, %v575
        %594 = vst [vmem:[#allocation2] sm:$0xff] %v578
        %595 = vst [vmem:[#allocation2 + $0x8] sm:$0xff] %v579
        %596 = vst [vmem:[#allocation2 + $0x10] sm:$0xff] %v580
        %597 = vst [vmem:[#allocation2 + $0x18] sm:$0xff] %v581
        %598 = vst [vmem:[#allocation2 + $0x20] sm:$0xff] %v582
        %599 = vst [vmem:[#allocation2 + $0x28] sm:$0xff] %v583
        %600 = vst [vmem:[#allocation2 + $0x30] sm:$0xff] %v584
        %601 = vst [vmem:[#allocation2 + $0x38] sm:$0xff] %v585
        %602 = vst [vmem:[#allocation2 + $0x40] sm:$0xff] %v586
        %603 = vst [vmem:[#allocation2 + $0x48] sm:$0xff] %v587
        %604 = vst [vmem:[#allocation2 + $0x50] sm:$0xff] %v588
        %605 = vst [vmem:[#allocation2 + $0x58] sm:$0xff] %v589
        %606 = vst [vmem:[#allocation2 + $0x60] sm:$0xff] %v590
        %607 = vst [vmem:[#allocation2 + $0x68] sm:$0xff] %v591
        %608 = vst [vmem:[#allocation2 + $0x70] sm:$0xff] %v592
        %609 = vst [vmem:[#allocation2 + $0x78] sm:$0xff] %v593
        %p610 = scmp.eq.s32.totalorder %s30, 3
        // Predicated region
        $region57: #{tpu_custom_call.1} parent=39 // pred_check
          %p611 = pneg %p610
        $region58: #{tpu_custom_call.1} parent=39 // pred_check_branch
          %613 = sbr.rel (%p611) target = $region60
        $region59: #{tpu_custom_call.1} parent=39 // pred_region
          %v614 = vld [vmem:[#allocation2] sm:$0xff]
          %v615 = vld [vmem:[#allocation2 + $0x8] sm:$0xff]
          %v616 = vld [vmem:[#allocation2 + $0x10] sm:$0xff]
          %v617 = vld [vmem:[#allocation2 + $0x18] sm:$0xff]
          %v618 = vld [vmem:[#allocation2 + $0x20] sm:$0xff]
          %v619 = vld [vmem:[#allocation2 + $0x28] sm:$0xff]
          %v620 = vld [vmem:[#allocation2 + $0x30] sm:$0xff]
          %v621 = vld [vmem:[#allocation2 + $0x38] sm:$0xff]
          %v622 = vld [vmem:[#allocation2 + $0x40] sm:$0xff]
          %v623 = vld [vmem:[#allocation2 + $0x48] sm:$0xff]
          %v624 = vld [vmem:[#allocation2 + $0x50] sm:$0xff]
          %v625 = vld [vmem:[#allocation2 + $0x58] sm:$0xff]
          %v626 = vld [vmem:[#allocation2 + $0x60] sm:$0xff]
          %v627 = vld [vmem:[#allocation2 + $0x68] sm:$0xff]
          %v628 = vld [vmem:[#allocation2 + $0x70] sm:$0xff]
          %v629 = vld [vmem:[#allocation2 + $0x78] sm:$0xff]
          %v630 = vld [vmem:[%s2] sm:$0x1]
          %v632 = vlaneseq
          %v633 = vshrl.u32 %v632, 7
          %v634 = vsub.s32 0, %v633
          %v635 = vrot.slane %v630, %v634
          %v637 = vadd.f32 %v614, %v635
          %v638 = vadd.f32 %v615, %v635
          %v639 = vadd.f32 %v616, %v635
          %v640 = vadd.f32 %v617, %v635
          %v641 = vadd.f32 %v618, %v635
          %v642 = vadd.f32 %v619, %v635
          %v643 = vadd.f32 %v620, %v635
          %v644 = vadd.f32 %v621, %v635
          %v645 = vadd.f32 %v622, %v635
          %v646 = vadd.f32 %v623, %v635
          %v647 = vadd.f32 %v624, %v635
          %v648 = vadd.f32 %v625, %v635
          %v649 = vadd.f32 %v626, %v635
          %v650 = vadd.f32 %v627, %v635
          %v651 = vadd.f32 %v628, %v635
          %v652 = vadd.f32 %v629, %v635
          %653 = vst [vmem:[#allocation2] sm:$0xff] %v637
          %654 = vst [vmem:[#allocation2 + $0x8] sm:$0xff] %v638
          %655 = vst [vmem:[#allocation2 + $0x10] sm:$0xff] %v639
          %656 = vst [vmem:[#allocation2 + $0x18] sm:$0xff] %v640
          %657 = vst [vmem:[#allocation2 + $0x20] sm:$0xff] %v641
          %658 = vst [vmem:[#allocation2 + $0x28] sm:$0xff] %v642
          %659 = vst [vmem:[#allocation2 + $0x30] sm:$0xff] %v643
          %660 = vst [vmem:[#allocation2 + $0x38] sm:$0xff] %v644
          %661 = vst [vmem:[#allocation2 + $0x40] sm:$0xff] %v645
          %662 = vst [vmem:[#allocation2 + $0x48] sm:$0xff] %v646
          %663 = vst [vmem:[#allocation2 + $0x50] sm:$0xff] %v647
          %664 = vst [vmem:[#allocation2 + $0x58] sm:$0xff] %v648
          %665 = vst [vmem:[#allocation2 + $0x60] sm:$0xff] %v649
          %666 = vst [vmem:[#allocation2 + $0x68] sm:$0xff] %v650
          %667 = vst [vmem:[#allocation2 + $0x70] sm:$0xff] %v651
          %668 = vst [vmem:[#allocation2 + $0x78] sm:$0xff] %v652
          %v669 = vld [vmem:[#allocation2] sm:$0xff]
          %v670 = vld [vmem:[#allocation2 + $0x8] sm:$0xff]
          %v671 = vld [vmem:[#allocation2 + $0x10] sm:$0xff]
          %v672 = vld [vmem:[#allocation2 + $0x18] sm:$0xff]
          %v673 = vld [vmem:[#allocation2 + $0x20] sm:$0xff]
          %v674 = vld [vmem:[#allocation2 + $0x28] sm:$0xff]
          %v675 = vld [vmem:[#allocation2 + $0x30] sm:$0xff]
          %v676 = vld [vmem:[#allocation2 + $0x38] sm:$0xff]
          %v677 = vld [vmem:[#allocation2 + $0x40] sm:$0xff]
          %v678 = vld [vmem:[#allocation2 + $0x48] sm:$0xff]
          %v679 = vld [vmem:[#allocation2 + $0x50] sm:$0xff]
          %v680 = vld [vmem:[#allocation2 + $0x58] sm:$0xff]
          %v681 = vld [vmem:[#allocation2 + $0x60] sm:$0xff]
          %v682 = vld [vmem:[#allocation2 + $0x68] sm:$0xff]
          %v683 = vld [vmem:[#allocation2 + $0x70] sm:$0xff]
          %v684 = vld [vmem:[#allocation2 + $0x78] sm:$0xff]
          %v685 = vpack.c.bf16 %v670, %v669
          %v686 = vpack.c.bf16 %v672, %v671
          %v687 = vpack.c.bf16 %v674, %v673
          %v688 = vpack.c.bf16 %v676, %v675
          %v689 = vpack.c.bf16 %v678, %v677
          %v690 = vpack.c.bf16 %v680, %v679
          %v691 = vpack.c.bf16 %v682, %v681
          %v692 = vpack.c.bf16 %v684, %v683
          %v693 = vld [vmem:[#allocation8] sm:$0xff]
          %v694 = vld [vmem:[#allocation8 + $0x8] sm:$0xff]
          %v695 = vld [vmem:[#allocation8 + $0x10] sm:$0xff]
          %v696 = vld [vmem:[#allocation8 + $0x18] sm:$0xff]
          %v697 = vld [vmem:[#allocation8 + $0x20] sm:$0xff]
          %v698 = vld [vmem:[#allocation8 + $0x28] sm:$0xff]
          %v699 = vld [vmem:[#allocation8 + $0x30] sm:$0xff]
          %v700 = vld [vmem:[#allocation8 + $0x38] sm:$0xff]
          %v701 = vld [vmem:[#allocation8 + $0x40] sm:$0xff]
          %v702 = vld [vmem:[#allocation8 + $0x48] sm:$0xff]
          %v703 = vld [vmem:[#allocation8 + $0x50] sm:$0xff]
          %v704 = vld [vmem:[#allocation8 + $0x58] sm:$0xff]
          %v705 = vld [vmem:[#allocation8 + $0x60] sm:$0xff]
          %v706 = vld [vmem:[#allocation8 + $0x68] sm:$0xff]
          %v707 = vld [vmem:[#allocation8 + $0x70] sm:$0xff]
          %v708 = vld [vmem:[#allocation8 + $0x78] sm:$0xff]
          %v709 = vld [vmem:[#allocation8 + $0x80] sm:$0xff]
          %v710 = vld [vmem:[#allocation8 + $0x88] sm:$0xff]
          %v711 = vld [vmem:[#allocation8 + $0x90] sm:$0xff]
          %v712 = vld [vmem:[#allocation8 + $0x98] sm:$0xff]
          %v713 = vld [vmem:[#allocation8 + $0xa0] sm:$0xff]
          %v714 = vld [vmem:[#allocation8 + $0xa8] sm:$0xff]
          %v715 = vld [vmem:[#allocation8 + $0xb0] sm:$0xff]
          %v716 = vld [vmem:[#allocation8 + $0xb8] sm:$0xff]
          %v717 = vld [vmem:[#allocation8 + $0xc0] sm:$0xff]
          %v718 = vld [vmem:[#allocation8 + $0xc8] sm:$0xff]
          %v719 = vld [vmem:[#allocation8 + $0xd0] sm:$0xff]
          %v720 = vld [vmem:[#allocation8 + $0xd8] sm:$0xff]
          %v721 = vld [vmem:[#allocation8 + $0xe0] sm:$0xff]
          %v722 = vld [vmem:[#allocation8 + $0xe8] sm:$0xff]
          %v723 = vld [vmem:[#allocation8 + $0xf0] sm:$0xff]
          %v724 = vld [vmem:[#allocation8 + $0xf8] sm:$0xff]
          %v725 = vld [vmem:[%s4] sm:$0xf]
          %v727 = vlaneseq
          %v728 = vshrl.u32 %v727, 7
          %v729 = vsub.s32 0, %v728
          %v730 = vrot.slane %v725, %v729
          %v731 = vlaneseq
          %v732 = vshrl.u32 %v731, 7
          %v733 = vsub.s32 1, %v732
          %v734 = vrot.slane %v725, %v733
          %v735 = vlaneseq
          %v736 = vshrl.u32 %v735, 7
          %v737 = vsub.s32 2, %v736
          %v738 = vrot.slane %v725, %v737
          %v739 = vlaneseq
          %v740 = vshrl.u32 %v739, 7
          %v741 = vsub.s32 3, %v740
          %v742 = vrot.slane %v725, %v741
          %v779 = vunpack.c.l.b16 %v693
          %v780 = vunpack.c.h.b16 %v693
          %v781 = vunpack.c.l.b16 %v694
          %v782 = vunpack.c.h.b16 %v694
          %v783 = vunpack.c.l.b16 %v695
          %v784 = vunpack.c.h.b16 %v695
          %v785 = vunpack.c.l.b16 %v696
          %v786 = vunpack.c.h.b16 %v696
          %v787 = vunpack.c.l.b16 %v697
          %v788 = vunpack.c.h.b16 %v697
          %v789 = vunpack.c.l.b16 %v698
          %v790 = vunpack.c.h.b16 %v698
          %v791 = vunpack.c.l.b16 %v699
          %v792 = vunpack.c.h.b16 %v699
          %v793 = vunpack.c.l.b16 %v700
          %v794 = vunpack.c.h.b16 %v700
          %v795 = vunpack.c.l.b16 %v701
          %v796 = vunpack.c.h.b16 %v701
          %v797 = vunpack.c.l.b16 %v702
          %v798 = vunpack.c.h.b16 %v702
          %v799 = vunpack.c.l.b16 %v703
          %v800 = vunpack.c.h.b16 %v703
          %v801 = vunpack.c.l.b16 %v704
          %v802 = vunpack.c.h.b16 %v704
          %v803 = vunpack.c.l.b16 %v705
          %v804 = vunpack.c.h.b16 %v705
          %v805 = vunpack.c.l.b16 %v706
          %v806 = vunpack.c.h.b16 %v706
          %v807 = vunpack.c.l.b16 %v707
          %v808 = vunpack.c.h.b16 %v707
          %v809 = vunpack.c.l.b16 %v708
          %v810 = vunpack.c.h.b16 %v708
          %v811 = vunpack.c.l.b16 %v709
          %v812 = vunpack.c.h.b16 %v709
          %v813 = vunpack.c.l.b16 %v710
          %v814 = vunpack.c.h.b16 %v710
          %v815 = vunpack.c.l.b16 %v711
          %v816 = vunpack.c.h.b16 %v711
          %v817 = vunpack.c.l.b16 %v712
          %v818 = vunpack.c.h.b16 %v712
          %v819 = vunpack.c.l.b16 %v713
          %v820 = vunpack.c.h.b16 %v713
          %v821 = vunpack.c.l.b16 %v714
          %v822 = vunpack.c.h.b16 %v714
          %v823 = vunpack.c.l.b16 %v715
          %v824 = vunpack.c.h.b16 %v715
          %v825 = vunpack.c.l.b16 %v716
          %v826 = vunpack.c.h.b16 %v716
          %v827 = vunpack.c.l.b16 %v717
          %v828 = vunpack.c.h.b16 %v717
          %v829 = vunpack.c.l.b16 %v718
          %v830 = vunpack.c.h.b16 %v718
          %v831 = vunpack.c.l.b16 %v719
          %v832 = vunpack.c.h.b16 %v719
          %v833 = vunpack.c.l.b16 %v720
          %v834 = vunpack.c.h.b16 %v720
          %v835 = vunpack.c.l.b16 %v721
          %v836 = vunpack.c.h.b16 %v721
          %v837 = vunpack.c.l.b16 %v722
          %v838 = vunpack.c.h.b16 %v722
          %v839 = vunpack.c.l.b16 %v723
          %v840 = vunpack.c.h.b16 %v723
          %v841 = vunpack.c.l.b16 %v724
          %v842 = vunpack.c.h.b16 %v724
          %v843 = vpack.c.b16 %v783, %v779
          %v844 = vpack.c.b16 %v784, %v780
          %v845 = vpack.c.b16 %v785, %v781
          %v846 = vpack.c.b16 %v786, %v782
          %v847 = vpack.c.b16 %v791, %v787
          %v848 = vpack.c.b16 %v792, %v788
          %v849 = vpack.c.b16 %v793, %v789
          %v850 = vpack.c.b16 %v794, %v790
          %v851 = vpack.c.b16 %v799, %v795
          %v852 = vpack.c.b16 %v800, %v796
          %v853 = vpack.c.b16 %v801, %v797
          %v854 = vpack.c.b16 %v802, %v798
          %v855 = vpack.c.b16 %v807, %v803
          %v856 = vpack.c.b16 %v808, %v804
          %v857 = vpack.c.b16 %v809, %v805
          %v858 = vpack.c.b16 %v810, %v806
          %v859 = vpack.c.b16 %v815, %v811
          %v860 = vpack.c.b16 %v816, %v812
          %v861 = vpack.c.b16 %v817, %v813
          %v862 = vpack.c.b16 %v818, %v814
          %v863 = vpack.c.b16 %v823, %v819
          %v864 = vpack.c.b16 %v824, %v820
          %v865 = vpack.c.b16 %v825, %v821
          %v866 = vpack.c.b16 %v826, %v822
          %v867 = vpack.c.b16 %v831, %v827
          %v868 = vpack.c.b16 %v832, %v828
          %v869 = vpack.c.b16 %v833, %v829
          %v870 = vpack.c.b16 %v834, %v830
          %v871 = vpack.c.b16 %v839, %v835
          %v872 = vpack.c.b16 %v840, %v836
          %v873 = vpack.c.b16 %v841, %v837
          %v874 = vpack.c.b16 %v842, %v838
          %907 = vmatprep.subr.bf16.mxu0 %v872
          %908 = vmatpush1.bf16.msra.mxu0 %v871
          %909 = vmatprep.subr.bf16.mxu0 %v868
          %910 = vmatpush1.bf16.msra.mxu0 %v867
          %911 = vmatprep.subr.bf16.mxu0 %v864
          %912 = vmatpush1.bf16.msra.mxu0 %v863
          %913 = vmatprep.subr.bf16.mxu0 %v860
          %914 = vmatpush1.bf16.msra.mxu0 %v859
          %915 = vmatprep.subr.bf16.mxu0 %v856
          %916 = vmatpush1.bf16.msra.mxu0 %v855
          %917 = vmatprep.subr.bf16.mxu0 %v852
          %918 = vmatpush1.bf16.msra.mxu0 %v851
          %919 = vmatprep.subr.bf16.mxu0 %v848
          %920 = vmatpush1.bf16.msra.mxu0 %v847
          %921 = vmatprep.subr.bf16.mxu0 %v844
          %922 = vmatpush1.bf16.msra.mxu0 %v843
          %923 = vmatprep.subr.bf16.mxu0 0
          %924 = vmatpush2.bf16.msra.mxu0 0
          %925 = vmatprep.subr.bf16.mxu0 0
          %926 = vmatpush2.bf16.msra.mxu0 0
          %927 = vmatprep.subr.bf16.mxu0 0
          %928 = vmatpush2.bf16.msra.mxu0 0
          %929 = vmatprep.subr.bf16.mxu0 0
          %930 = vmatpush2.bf16.msra.mxu0 0
          %931 = vmatprep.subr.bf16.mxu0 0
          %932 = vmatpush2.bf16.msra.mxu0 0
          %933 = vmatprep.subr.bf16.mxu0 0
          %934 = vmatpush2.bf16.msra.mxu0 0
          %935 = vmatprep.subr.bf16.mxu0 0
          %936 = vmatpush2.bf16.msra.mxu0 0
          %937 = vmatprep.subr.bf16.mxu0 0
          %938 = vmatpush2.bf16.msra.mxu0 0
          %939 = vmatprep.mubr.bf16.mxu0 0
          %940 = vmatmul.mubr.bf16.gmra.mxu0 %v685
          %v941 = vpop.f32.mrf.mxu0
          %v942 = vadd.f32 %v730, %v941
          %v943 = vpop.f32.mrf.mxu0
          %v944 = vadd.f32 %v734, %v943
          %v945 = vpop.f32.mrf.mxu0
          %v946 = vadd.f32 %v730, %v945
          %v947 = vpop.f32.mrf.mxu0
          %v948 = vadd.f32 %v734, %v947
          %949 = vmatprep.mubr.bf16.mxu0 0
          %950 = vmatmul.mubr.bf16.gmra.mxu0 %v686
          %v951 = vpop.f32.mrf.mxu0
          %v952 = vadd.f32 %v730, %v951
          %v953 = vpop.f32.mrf.mxu0
          %v954 = vadd.f32 %v734, %v953
          %v955 = vpop.f32.mrf.mxu0
          %v956 = vadd.f32 %v730, %v955
          %v957 = vpop.f32.mrf.mxu0
          %v958 = vadd.f32 %v734, %v957
          %959 = vmatprep.mubr.bf16.mxu0 0
          %960 = vmatmul.mubr.bf16.gmra.mxu0 %v687
          %v961 = vpop.f32.mrf.mxu0
          %v962 = vadd.f32 %v730, %v961
          %v963 = vpop.f32.mrf.mxu0
          %v964 = vadd.f32 %v734, %v963
          %v965 = vpop.f32.mrf.mxu0
          %v966 = vadd.f32 %v730, %v965
          %v967 = vpop.f32.mrf.mxu0
          %v968 = vadd.f32 %v734, %v967
          %969 = vmatprep.mubr.bf16.mxu0 0
          %970 = vmatmul.mubr.bf16.gmra.mxu0 %v688
          %v971 = vpop.f32.mrf.mxu0
          %v972 = vadd.f32 %v730, %v971
          %v973 = vpop.f32.mrf.mxu0
          %v974 = vadd.f32 %v734, %v973
          %v975 = vpop.f32.mrf.mxu0
          %v976 = vadd.f32 %v730, %v975
          %v977 = vpop.f32.mrf.mxu0
          %v978 = vadd.f32 %v734, %v977
          %979 = vmatprep.mubr.bf16.mxu0 0
          %980 = vmatmul.mubr.bf16.gmra.mxu0 %v689
          %v981 = vpop.f32.mrf.mxu0
          %v982 = vadd.f32 %v730, %v981
          %v983 = vpop.f32.mrf.mxu0
          %v984 = vadd.f32 %v734, %v983
          %v985 = vpop.f32.mrf.mxu0
          %v986 = vadd.f32 %v730, %v985
          %v987 = vpop.f32.mrf.mxu0
          %v988 = vadd.f32 %v734, %v987
          %989 = vmatprep.mubr.bf16.mxu0 0
          %990 = vmatmul.mubr.bf16.gmra.mxu0 %v690
          %v991 = vpop.f32.mrf.mxu0
          %v992 = vadd.f32 %v730, %v991
          %v993 = vpop.f32.mrf.mxu0
          %v994 = vadd.f32 %v734, %v993
          %v995 = vpop.f32.mrf.mxu0
          %v996 = vadd.f32 %v730, %v995
          %v997 = vpop.f32.mrf.mxu0
          %v998 = vadd.f32 %v734, %v997
          %999 = vmatprep.mubr.bf16.mxu0 0
          %1000 = vmatmul.mubr.bf16.gmra.mxu0 %v691
          %v1001 = vpop.f32.mrf.mxu0
          %v1002 = vadd.f32 %v730, %v1001
          %v1003 = vpop.f32.mrf.mxu0
          %v1004 = vadd.f32 %v734, %v1003
          %v1005 = vpop.f32.mrf.mxu0
          %v1006 = vadd.f32 %v730, %v1005
          %v1007 = vpop.f32.mrf.mxu0
          %v1008 = vadd.f32 %v734, %v1007
          %1009 = vmatprep.mubr.bf16.mxu0 0
          %1010 = vmatmul.mubr.bf16.gmra.mxu0 %v692
          %v1011 = vpop.f32.mrf.mxu0
          %v1012 = vadd.f32 %v730, %v1011
          %v1013 = vpop.f32.mrf.mxu0
          %v1014 = vadd.f32 %v734, %v1013
          %v1015 = vpop.f32.mrf.mxu0
          %v1016 = vadd.f32 %v730, %v1015
          %v1017 = vpop.f32.mrf.mxu0
          %v1018 = vadd.f32 %v734, %v1017
          %1019 = vdwg.mxu0
          %1020 = vmatprep.subr.bf16.mxu0 %v874
          %1021 = vmatpush1.bf16.msra.mxu0 %v873
          %1022 = vmatprep.subr.bf16.mxu0 %v870
          %1023 = vmatpush1.bf16.msra.mxu0 %v869
          %1024 = vmatprep.subr.bf16.mxu0 %v866
          %1025 = vmatpush1.bf16.msra.mxu0 %v865
          %1026 = vmatprep.subr.bf16.mxu0 %v862
          %1027 = vmatpush1.bf16.msra.mxu0 %v861
          %1028 = vmatprep.subr.bf16.mxu0 %v858
          %1029 = vmatpush1.bf16.msra.mxu0 %v857
          %1030 = vmatprep.subr.bf16.mxu0 %v854
          %1031 = vmatpush1.bf16.msra.mxu0 %v853
          %1032 = vmatprep.subr.bf16.mxu0 %v850
          %1033 = vmatpush1.bf16.msra.mxu0 %v849
          %1034 = vmatprep.subr.bf16.mxu0 %v846
          %1035 = vmatpush1.bf16.msra.mxu0 %v845
          %1036 = vmatprep.subr.bf16.mxu0 0
          %1037 = vmatpush2.bf16.msra.mxu0 0
          %1038 = vmatprep.subr.bf16.mxu0 0
          %1039 = vmatpush2.bf16.msra.mxu0 0
          %1040 = vmatprep.subr.bf16.mxu0 0
          %1041 = vmatpush2.bf16.msra.mxu0 0
          %1042 = vmatprep.subr.bf16.mxu0 0
          %1043 = vmatpush2.bf16.msra.mxu0 0
          %1044 = vmatprep.subr.bf16.mxu0 0
          %1045 = vmatpush2.bf16.msra.mxu0 0
          %1046 = vmatprep.subr.bf16.mxu0 0
          %1047 = vmatpush2.bf16.msra.mxu0 0
          %1048 = vmatprep.subr.bf16.mxu0 0
          %1049 = vmatpush2.bf16.msra.mxu0 0
          %1050 = vmatprep.subr.bf16.mxu0 0
          %1051 = vmatpush2.bf16.msra.mxu0 0
          %1052 = vmatprep.mubr.bf16.mxu0 0
          %1053 = vmatmul.mubr.bf16.gmra.mxu0 %v685
          %v1054 = vpop.f32.mrf.mxu0
          %v1055 = vadd.f32 %v738, %v1054
          %v1056 = vpop.f32.mrf.mxu0
          %v1057 = vadd.f32 %v742, %v1056
          %v1058 = vpop.f32.mrf.mxu0
          %v1059 = vadd.f32 %v738, %v1058
          %v1060 = vpop.f32.mrf.mxu0
          %v1061 = vadd.f32 %v742, %v1060
          %1062 = vmatprep.mubr.bf16.mxu0 0
          %1063 = vmatmul.mubr.bf16.gmra.mxu0 %v686
          %v1064 = vpop.f32.mrf.mxu0
          %v1065 = vadd.f32 %v738, %v1064
          %v1066 = vpop.f32.mrf.mxu0
          %v1067 = vadd.f32 %v742, %v1066
          %v1068 = vpop.f32.mrf.mxu0
          %v1069 = vadd.f32 %v738, %v1068
          %v1070 = vpop.f32.mrf.mxu0
          %v1071 = vadd.f32 %v742, %v1070
          %1072 = vmatprep.mubr.bf16.mxu0 0
          %1073 = vmatmul.mubr.bf16.gmra.mxu0 %v687
          %v1074 = vpop.f32.mrf.mxu0
          %v1075 = vadd.f32 %v738, %v1074
          %v1076 = vpop.f32.mrf.mxu0
          %v1077 = vadd.f32 %v742, %v1076
          %v1078 = vpop.f32.mrf.mxu0
          %v1079 = vadd.f32 %v738, %v1078
          %v1080 = vpop.f32.mrf.mxu0
          %v1081 = vadd.f32 %v742, %v1080
          %1082 = vmatprep.mubr.bf16.mxu0 0
          %1083 = vmatmul.mubr.bf16.gmra.mxu0 %v688
          %v1084 = vpop.f32.mrf.mxu0
          %v1085 = vadd.f32 %v738, %v1084
          %v1086 = vpop.f32.mrf.mxu0
          %v1087 = vadd.f32 %v742, %v1086
          %v1088 = vpop.f32.mrf.mxu0
          %v1089 = vadd.f32 %v738, %v1088
          %v1090 = vpop.f32.mrf.mxu0
          %v1091 = vadd.f32 %v742, %v1090
          %1092 = vmatprep.mubr.bf16.mxu0 0
          %1093 = vmatmul.mubr.bf16.gmra.mxu0 %v689
          %v1094 = vpop.f32.mrf.mxu0
          %v1095 = vadd.f32 %v738, %v1094
          %v1096 = vpop.f32.mrf.mxu0
          %v1097 = vadd.f32 %v742, %v1096
          %v1098 = vpop.f32.mrf.mxu0
          %v1099 = vadd.f32 %v738, %v1098
          %v1100 = vpop.f32.mrf.mxu0
          %v1101 = vadd.f32 %v742, %v1100
          %1102 = vmatprep.mubr.bf16.mxu0 0
          %1103 = vmatmul.mubr.bf16.gmra.mxu0 %v690
          %v1104 = vpop.f32.mrf.mxu0
          %v1105 = vadd.f32 %v738, %v1104
          %v1106 = vpop.f32.mrf.mxu0
          %v1107 = vadd.f32 %v742, %v1106
          %v1108 = vpop.f32.mrf.mxu0
          %v1109 = vadd.f32 %v738, %v1108
          %v1110 = vpop.f32.mrf.mxu0
          %v1111 = vadd.f32 %v742, %v1110
          %1112 = vmatprep.mubr.bf16.mxu0 0
          %1113 = vmatmul.mubr.bf16.gmra.mxu0 %v691
          %v1114 = vpop.f32.mrf.mxu0
          %v1115 = vadd.f32 %v738, %v1114
          %v1116 = vpop.f32.mrf.mxu0
          %v1117 = vadd.f32 %v742, %v1116
          %v1118 = vpop.f32.mrf.mxu0
          %v1119 = vadd.f32 %v738, %v1118
          %v1120 = vpop.f32.mrf.mxu0
          %v1121 = vadd.f32 %v742, %v1120
          %1122 = vmatprep.mubr.bf16.mxu0 0
          %1123 = vmatmul.mubr.bf16.gmra.mxu0 %v692
          %v1124 = vpop.f32.mrf.mxu0
          %v1125 = vadd.f32 %v738, %v1124
          %v1126 = vpop.f32.mrf.mxu0
          %v1127 = vadd.f32 %v742, %v1126
          %v1128 = vpop.f32.mrf.mxu0
          %v1129 = vadd.f32 %v738, %v1128
          %v1130 = vpop.f32.mrf.mxu0
          %v1131 = vadd.f32 %v742, %v1130
          %1132 = vdwg.mxu0
          %1133 = vst [vmem:[%s312] sm:$0xff] %v942
          %1134 = vst [vmem:[%s312 + $0x8] sm:$0xff] %v944
          %1135 = vst [vmem:[%s312 + $0x10] sm:$0xff] %v1055
          %1136 = vst [vmem:[%s312 + $0x18] sm:$0xff] %v1057
          %1137 = vst [vmem:[%s312 + $0x20] sm:$0xff] %v946
          %1138 = vst [vmem:[%s312 + $0x28] sm:$0xff] %v948
          %1139 = vst [vmem:[%s312 + $0x30] sm:$0xff] %v1059
          %1140 = vst [vmem:[%s312 + $0x38] sm:$0xff] %v1061
          %1141 = vst [vmem:[%s312 + $0x40] sm:$0xff] %v952
          %1142 = vst [vmem:[%s312 + $0x48] sm:$0xff] %v954
          %1143 = vst [vmem:[%s312 + $0x50] sm:$0xff] %v1065
          %1144 = vst [vmem:[%s312 + $0x58] sm:$0xff] %v1067
          %1145 = vst [vmem:[%s312 + $0x60] sm:$0xff] %v956
          %1146 = vst [vmem:[%s312 + $0x68] sm:$0xff] %v958
          %1147 = vst [vmem:[%s312 + $0x70] sm:$0xff] %v1069
          %1148 = vst [vmem:[%s312 + $0x78] sm:$0xff] %v1071
          %1149 = vst [vmem:[%s312 + $0x80] sm:$0xff] %v962
          %1150 = vst [vmem:[%s312 + $0x88] sm:$0xff] %v964
          %1151 = vst [vmem:[%s312 + $0x90] sm:$0xff] %v1075
          %1152 = vst [vmem:[%s312 + $0x98] sm:$0xff] %v1077
          %1153 = vst [vmem:[%s312 + $0xa0] sm:$0xff] %v966
          %1154 = vst [vmem:[%s312 + $0xa8] sm:$0xff] %v968
          %1155 = vst [vmem:[%s312 + $0xb0] sm:$0xff] %v1079
          %1156 = vst [vmem:[%s312 + $0xb8] sm:$0xff] %v1081
          %1157 = vst [vmem:[%s312 + $0xc0] sm:$0xff] %v972
          %1158 = vst [vmem:[%s312 + $0xc8] sm:$0xff] %v974
          %1159 = vst [vmem:[%s312 + $0xd0] sm:$0xff] %v1085
          %1160 = vst [vmem:[%s312 + $0xd8] sm:$0xff] %v1087
          %1161 = vst [vmem:[%s312 + $0xe0] sm:$0xff] %v976
          %1162 = vst [vmem:[%s312 + $0xe8] sm:$0xff] %v978
          %1163 = vst [vmem:[%s312 + $0xf0] sm:$0xff] %v1089
          %1164 = vst [vmem:[%s312 + $0xf8] sm:$0xff] %v1091
          %1165 = vst [vmem:[%s312 + $0x100] sm:$0xff] %v982
          %1166 = vst [vmem:[%s312 + $0x108] sm:$0xff] %v984
          %1167 = vst [vmem:[%s312 + $0x110] sm:$0xff] %v1095
          %1168 = vst [vmem:[%s312 + $0x118] sm:$0xff] %v1097
          %1169 = vst [vmem:[%s312 + $0x120] sm:$0xff] %v986
          %1170 = vst [vmem:[%s312 + $0x128] sm:$0xff] %v988
          %1171 = vst [vmem:[%s312 + $0x130] sm:$0xff] %v1099
          %1172 = vst [vmem:[%s312 + $0x138] sm:$0xff] %v1101
          %1173 = vst [vmem:[%s312 + $0x140] sm:$0xff] %v992
          %1174 = vst [vmem:[%s312 + $0x148] sm:$0xff] %v994
          %1175 = vst [vmem:[%s312 + $0x150] sm:$0xff] %v1105
          %1176 = vst [vmem:[%s312 + $0x158] sm:$0xff] %v1107
          %1177 = vst [vmem:[%s312 + $0x160] sm:$0xff] %v996
          %1178 = vst [vmem:[%s312 + $0x168] sm:$0xff] %v998
          %1179 = vst [vmem:[%s312 + $0x170] sm:$0xff] %v1109
          %1180 = vst [vmem:[%s312 + $0x178] sm:$0xff] %v1111
          %1181 = vst [vmem:[%s312 + $0x180] sm:$0xff] %v1002
          %1182 = vst [vmem:[%s312 + $0x188] sm:$0xff] %v1004
          %1183 = vst [vmem:[%s312 + $0x190] sm:$0xff] %v1115
          %1184 = vst [vmem:[%s312 + $0x198] sm:$0xff] %v1117
          %1185 = vst [vmem:[%s312 + $0x1a0] sm:$0xff] %v1006
          %1186 = vst [vmem:[%s312 + $0x1a8] sm:$0xff] %v1008
          %1187 = vst [vmem:[%s312 + $0x1b0] sm:$0xff] %v1119
          %1188 = vst [vmem:[%s312 + $0x1b8] sm:$0xff] %v1121
          %1189 = vst [vmem:[%s312 + $0x1c0] sm:$0xff] %v1012
          %1190 = vst [vmem:[%s312 + $0x1c8] sm:$0xff] %v1014
          %1191 = vst [vmem:[%s312 + $0x1d0] sm:$0xff] %v1125
          %1192 = vst [vmem:[%s312 + $0x1d8] sm:$0xff] %v1127
          %1193 = vst [vmem:[%s312 + $0x1e0] sm:$0xff] %v1016
          %1194 = vst [vmem:[%s312 + $0x1e8] sm:$0xff] %v1018
          %1195 = vst [vmem:[%s312 + $0x1f0] sm:$0xff] %v1129
          %1196 = vst [vmem:[%s312 + $0x1f8] sm:$0xff] %v1131
        $region60: #{tpu_custom_call.1} parent=39 // pred_fallthru
          _
        %s1197 = sand.u32 %s162, 1
        %s1198 = scalar_lea.sflag [#allocation5], %s1197
        %s1199 = sand.u32 %s162, 1
        %s1200 = smul.addr %s1199, 512
        %s1201 = scalar_lea.vmem [#allocation9], %s1200
        // Predicated region
        $region61: #{tpu_custom_call.1} parent=39 // pred_check
          %p1202 = pneg %p172
        $region62: #{tpu_custom_call.1} parent=39 // pred_check_branch
          %1204 = sbr.rel (%p1202) target = $region64
        $region63: #{tpu_custom_call.1} parent=39 // pred_region
          %s1205 = smul.u32 16, %s29
          %s1207 = ssub.s32 8192, 8192
          %1208 = vsyncadd %s1198, %s1207
          %s1209 = smul.addr %s1205, 4
          %s1210 = smul.addr %s1209, 128
          %s1211 = scalar_lea.hbm %s5, %s1210
          %s1212 = sshll.u32 %s1201, 4
          %s1213 = int_to_ptr.vmem [resolvable:$true] %s1212
          %1218 = dma.vmem_to_hbm [thread:$0]  %s1213, 8192, %s1211, %s1198, 512, 512, 32
        $region64: #{tpu_custom_call.1} parent=39 // pred_fallthru
          _
      $region40: #{tpu_custom_call.1} parent=5 // pred_fallthru
        _
      %p1219 = scmp.le.s32.totalorder 2, %s20
      // Predicated region
      $region65: #{tpu_custom_call.1} parent=5 // pred_check
        %p1220 = pneg %p1219
      $region66: #{tpu_custom_call.1} parent=5 // pred_check_branch
        %1222 = sbr.rel (%p1220) target = $region68
      $region67: #{tpu_custom_call.1} parent=5 // pred_region
        %s1223 = ssub.s32 %s20, 2
        // Predicated region
        $region69: #{tpu_custom_call.1} parent=67 // pred_check
          %p1224 = pneg %p178
        $region70: #{tpu_custom_call.1} parent=67 // pred_check_branch
          %1226 = sbr.rel (%p1224) target = $region72
        $region71: #{tpu_custom_call.1} parent=67 // pred_region
          %s1227 = sand.u32 %s163, 1
          %s1228 = scalar_lea.sflag [#allocation5], %s1227
          %s1229 = sand.u32 %s163, 1
          %s1230 = smul.addr %s1229, 512
          %s1231 = scalar_lea.vmem [#allocation9], %s1230
          %1232 = dma.done %s1228, 8192
        $region72: #{tpu_custom_call.1} parent=67 // pred_fallthru
          _
      $region68: #{tpu_custom_call.1} parent=5 // pred_fallthru
        _
    $region6: #{tpu_custom_call.1} parent=1 // loop_footer
      %s24 = sadd.s32 1, %s20
    $region7: #{tpu_custom_call.1} parent=1 // loop_footer_branch
      %19 = sbr.rel target = $region3
    $region8: #{tpu_custom_call.1} parent=1 // loop_exit
      _
    %1233 = vsyncpa [#allocation4], 1
    %s1234 = scalar_lea.sflag [#allocation4], 1
    %1235 = vsyncpa %s1234, 1
    %1236 = vsyncpa [#allocation7], 1
    %s1237 = scalar_lea.sflag [#allocation7], 1
    %1238 = vsyncpa %s1237, 1
    %1239 = vsyncpa [#allocation5], 1
    %s1240 = scalar_lea.sflag [#allocation5], 1
    %1241 = vsyncpa %s1240, 1

</llo_original>
